<compile_context>
chip_gen: v5e
topology: v5e:2x2
jax: 0.10.0
libtpu: 0.0.40
codegen_flags: <defaults>
</compile_context>

<pallas_src>
import functools

import jax
import jax.numpy as jnp
from jax.experimental import pallas as pl
from jax.experimental.pallas import tpu as pltpu


def _round_up(x: int, m: int) -> int:
    return ((x + m - 1) // m) * m


def _nsp_head_kernel(x_ref, w_ref, b_ref, o_ref, *, compute_dtype):
    # x_ref: [TB, H] (VMEM), w_ref: [2, H] (VMEM, lane-dense),
    # b_ref: [1, 2] f32 (VMEM, invariant), o_ref: [TB, 2] (VMEM)
    #
    # Cast at the MXU input (bf16 by default) while keeping f32 accumulation: on v5e this
    # avoids an MXU-bound flip from the N=2->128 padding; on v6e/v7x it is hidden under DMA.
    x = x_ref[...].astype(compute_dtype)
    w = w_ref[...].astype(compute_dtype)
    acc = jax.lax.dot_general(
        x,
        w,
        dimension_numbers=(((1,), (1,)), ((), ())),  # contract hidden axes; W stays [2, H]
        preferred_element_type=jnp.float32,
    )  # [TB, 2] f32
    # TODO(synk): hoisting W^T into a VMEM scratch under pl.when(pid == 0) was considered,
    # but the only grid axis is "parallel" (core-split on v7x megacore), so a pid==0 init
    # would leave the second TensorCore's scratch uninitialized; the per-step RHS relayout
    # is hidden under the x-tile DMA in this HBM-bound kernel anyway.
    o_ref[...] = (acc + b_ref[...]).astype(o_ref.dtype)


def bert_only_nsp_head(pooled_output: jax.Array, weight: jax.Array, bias: jax.Array,
                       *, small_batch_cutoff: int = 256, max_block_b: int = 1024,
                       mxu_input_dtype=jnp.bfloat16) -> jax.Array:
    """pooled_output: [B, H]; weight: [2, H] (PyTorch nn.Linear layout); bias: [2]."""
    B, H = pooled_output.shape
    n_out, hw = weight.shape
    assert hw == H and n_out == 2

    compute_dtype = mxu_input_dtype if mxu_input_dtype is not None else pooled_output.dtype
    kernel = functools.partial(_nsp_head_kernel, compute_dtype=compute_dtype)

    # Bias as a (1, 2) f32 VMEM row: one tiny DMA (constant index_map) and a plain
    # broadcast vadd per step instead of per-step iota+compare+select from SMEM scalars.
    bias_row = bias.astype(jnp.float32).reshape(1, n_out)

    x_item = jnp.dtype(pooled_output.dtype).itemsize
    w_item = jnp.dtype(weight.dtype).itemsize
    out_item = x_item
    cost = pl.CostEstimate(
        flops=2 * B * H * n_out,
        transcendentals=0,
        bytes_accessed=B * H * x_item + n_out * H * w_item + B * n_out * out_item + n_out * 4,
    )

    def grid_vmem_bytes(tb: int) -> int:
        # double-buffered x tile + double-buffered lane-padded (tb, 2->128) output tile
        # + weight (2 bufs, sublane-padded 2->8) + bias (2 bufs, one (8,128) tile)
        return (2 * tb * H * x_item
                + 2 * tb * 128 * out_item
                + 2 * 8 * H * w_item
                + 2 * 8 * 128 * 4)

    if B <= small_batch_cutoff:
        # Single grid-less invocation: no pipeline prologue/epilogue, no double buffers.
        # Cutoff is 256 so larger batches always give v7x's two TensorCores work to split.
        need = (_round_up(B, 8) * H * x_item
                + _round_up(B, 8) * 128 * out_item
                + 8 * H * w_item
                + 8 * 128 * 4)
        limit = int(min(max(need + (2 << 20), 16 << 20), 56 << 20))
        return pl.pallas_call(
            kernel,
            out_shape=jax.ShapeDtypeStruct((B, n_out), pooled_output.dtype),
            in_specs=[
                pl.BlockSpec(memory_space=pltpu.MemorySpace.VMEM),   # x  [B, H]
                pl.BlockSpec(memory_space=pltpu.MemorySpace.VMEM),   # W  [2, H]
                pl.BlockSpec(memory_space=pltpu.MemorySpace.VMEM),   # b  [1, 2]
            ],
            out_specs=pl.BlockSpec(memory_space=pltpu.MemorySpace.VMEM),
            compiler_params=pltpu.CompilerParams(vmem_limit_bytes=limit),
            cost_estimate=cost,
        )(pooled_output, weight, bias_row)

    # Large-batch path: tile the batch axis so both v7x TensorCores see work (>= 2 programs),
    # keep tiles large for HBM roofline, and size them against an explicit VMEM budget.
    max_block_b = max(8, (max_block_b // 8) * 8)            # sublane rule: multiple of 8
    tb = min(max_block_b, _round_up(pl.cdiv(B, 2), 8))      # >= 2 grid points
    vmem_budget = 24 << 20
    while grid_vmem_bytes(tb) > vmem_budget and tb > 256:
        tb = max(256, _round_up(tb // 2, 8))
    grid = (pl.cdiv(B, tb),)
    limit = int(min(max(grid_vmem_bytes(tb) + (2 << 20), 16 << 20), 56 << 20))

    return pl.pallas_call(
        kernel,
        out_shape=jax.ShapeDtypeStruct((B, n_out), pooled_output.dtype),
        grid=grid,
        in_specs=[
            pl.BlockSpec((tb, H), lambda i: (i, 0)),         # x tile [tb, H]
            pl.BlockSpec((n_out, H), lambda i: (0, 0)),      # W [2, H] lane-dense, invariant
            pl.BlockSpec((1, n_out), lambda i: (0, 0)),      # b [1, 2], invariant
        ],
        out_specs=pl.BlockSpec((tb, n_out), lambda i: (i, 0)),
        compiler_params=pltpu.CompilerParams(
            dimension_semantics=("parallel",),               # megacore split on v7x
            vmem_limit_bytes=limit,
        ),
        cost_estimate=cost,
    )(pooled_output, weight, bias_row)


if __name__ == "__main__":
    key = jax.random.PRNGKey(0)
    k_x, k_w, k_b = jax.random.split(key, 3)

    B = 8          # batch (pooled-output rows)
    H = 128        # config.hidden_size (small demo size)
    N_CLASSES = 2  # NSP head output

    pooled_output = jax.random.normal(k_x, (B, H), dtype=jnp.float32)
    # Synthetic parameters, shapes match nn.Linear(hidden_size, 2).
    weight = jax.random.normal(k_w, (N_CLASSES, H), dtype=jnp.float32) * 0.02
    bias = jax.random.normal(k_b, (N_CLASSES,), dtype=jnp.float32) * 0.02

    def ref_fn(x):
        return x @ weight.T + bias

    # bf16 MXU inputs with f32 accumulation -> compare with loose tolerances vs f32 reference.
    ATOL, RTOL = 2e-2, 2e-2

    # Small-batch (grid-less) path.
    out = jax.block_until_ready(bert_only_nsp_head(pooled_output, weight, bias))
    assert out.shape == (B, N_CLASSES)
    assert jnp.allclose(out, ref_fn(pooled_output), atol=ATOL, rtol=RTOL), \
        "mismatch vs reference (small path)"

    # Batch-tiled path: 2 programs (both v7x TensorCores), exact multiple of the tile.
    B_big = 640
    x_big = jax.random.normal(jax.random.PRNGKey(1), (B_big, H), dtype=jnp.float32)
    out_big = jax.block_until_ready(bert_only_nsp_head(x_big, weight, bias))
    assert out_big.shape == (B_big, N_CLASSES)
    assert jnp.allclose(out_big, ref_fn(x_big), atol=ATOL, rtol=RTOL), \
        "mismatch vs reference (tiled path)"

    # Batch-tiled path with a partial last tile (B % tb != 0).
    B_odd = 520
    x_odd = jax.random.normal(jax.random.PRNGKey(2), (B_odd, H), dtype=jnp.float32)
    out_odd = jax.block_until_ready(bert_only_nsp_head(x_odd, weight, bias))
    assert out_odd.shape == (B_odd, N_CLASSES)
    assert jnp.allclose(out_odd, ref_fn(x_odd), atol=ATOL, rtol=RTOL), \
        "mismatch vs reference (partial-tile path)"

    print("KERNEL_OK")
</pallas_src>

<mosaic_0001>
module attributes {stable_mosaic.version = 11 : i64} {
  func.func @_nsp_head_kernel(%arg0: memref<8x128xf32, #tpu.memory_space<vmem>>, %arg1: memref<2x128xf32, #tpu.memory_space<vmem>>, %arg2: memref<1x2xf32, #tpu.memory_space<vmem>>, %arg3: memref<8x2xf32, #tpu.memory_space<vmem>>) attributes {dimension_semantics = [], scalar_prefetch = 0 : i64, scratch_operands = 0 : i64, tpu.core_type = #tpu.core_type<tc>} {
    %c0 = arith.constant 0 : index
    %c0_0 = arith.constant 0 : index
    %0 = vector.load %arg0[%c0, %c0_0] : memref<8x128xf32, #tpu.memory_space<vmem>>, vector<8x128xf32>
    %1 = arith.truncf %0 : vector<8x128xf32> to vector<8x128xbf16>
    %c0_1 = arith.constant 0 : index
    %c0_2 = arith.constant 0 : index
    %2 = vector.load %arg1[%c0_1, %c0_2] : memref<2x128xf32, #tpu.memory_space<vmem>>, vector<2x128xf32>
    %3 = arith.truncf %2 : vector<2x128xf32> to vector<2x128xbf16>
    %cst = arith.constant dense<0.000000e+00> : vector<8x2xf32>
    %4 = tpu.matmul %1, %3, %cst {dimension_numbers = #tpu.dot_dimension_numbers<[1], [1], [0], [0], [0, 0, 1, 0], [], []>} : vector<8x128xbf16>, vector<2x128xbf16>, vector<8x2xf32> -> vector<8x2xf32>
    %c0_3 = arith.constant 0 : index
    %c0_4 = arith.constant 0 : index
    %5 = vector.load %arg2[%c0_3, %c0_4] : memref<1x2xf32, #tpu.memory_space<vmem>>, vector<1x2xf32>
    %6 = vector.broadcast %5 : vector<1x2xf32> to vector<8x2xf32>
    %7 = arith.addf %4, %6 : vector<8x2xf32>
    %c0_5 = arith.constant 0 : index
    %c0_6 = arith.constant 0 : index
    %8 = vector.load %arg3[%c0_5, %c0_6] : memref<8x2xf32, #tpu.memory_space<vmem>>, vector<8x2xf32>
    tpu.vector_store %arg3[%c0_5, %c0_6], %7 {strides = array<i32>} : memref<8x2xf32, #tpu.memory_space<vmem>>, vector<8x2xf32>,
    return
  }
}

</mosaic_0001>

<llo_original>
// kernel: tpu_custom_call.1
$region0: #{tpu_custom_call.1}
  #allocation0 [shape = 'u32[]', space=smem, size = 0x4, offset = 0x4, fixed_abs, tag = 'smem constant byte address 0x4 - core index']
  #allocation1 [shape = 'u32[72,128]{1,0:T(1,128)}', space=vmem, size = 0x9000, scoped, tag = 'internal scratch']
  %s0 = inlined_call_operand.hbm [shape: f32[8,128], index: 0, kind: input, shape index: {}]
  %s1 = inlined_call_operand.hbm [shape: f32[2,128], index: 1, kind: input, shape index: {}]
  %s2 = inlined_call_operand.vmem [shape: f32[1,2], index: 2, kind: input, shape index: {}]
  %s3 = inlined_call_operand.vmem [shape: f32[8,2], index: 3, kind: output, shape index: {}]
  %s4 = sld [smem:[#allocation0]]
  $region30: #{tpu_custom_call.1} parent=0
    _
  %s6 = ssub.s32 1, %s4
  %s7 = scalar_select 0, %s6, %s4
  $region1: #{tpu_custom_call.1} parent=0
    #allocation2 [shape = 'u8[4096]{0}', space=vmem, size = 0x1000, scoped, tag = 'input window, operand 0, single buffered']
    #allocation3 [shape = 's32[1]{0}', space=sflag, size = 0x4, scoped, tag = 'scoped memory for tpu_custom_call.1']
    #allocation4 [shape = 'u8[1024]{0}', space=vmem, size = 0x400, scoped, tag = 'input window, operand 1, single buffered']
    #allocation5 [shape = 's32[1]{0}', space=sflag, size = 0x4, scoped, tag = 'scoped memory for tpu_custom_call.1']
    %8 = vsyncpa [#allocation3], 0
    %9 = vsyncpa [#allocation5], 0
    // Predicated region
    $region2: #{tpu_custom_call.1} parent=1 // pred_check
      _
    $region3: #{tpu_custom_call.1} parent=1 // pred_check_branch
      %11 = sbr.rel (0) target = $region5
    $region4: #{tpu_custom_call.1} parent=1 // pred_region
      %13 = vsyncadd [#allocation3], 0
      %s15 = sshll.u32 %s0, 4
      %s16 = int_to_ptr.hbm [resolvable:$true] %s15
      %s17 = sshll.u32 [#allocation2], 4
      %s18 = int_to_ptr.vmem [resolvable:$true] %s17
      %20 = dma.hbm_to_vmem [thread:$0]  %s16, 128, %s18, [#allocation3]
    $region5: #{tpu_custom_call.1} parent=1 // pred_fallthru
      _
    // Predicated region
    $region6: #{tpu_custom_call.1} parent=1 // pred_check
      _
    $region7: #{tpu_custom_call.1} parent=1 // pred_check_branch
      %22 = sbr.rel (0) target = $region9
    $region8: #{tpu_custom_call.1} parent=1 // pred_region
      %24 = vsyncadd [#allocation5], 0
      %s26 = sshll.u32 %s1, 4
      %s27 = int_to_ptr.hbm [resolvable:$true] %s26
      %s28 = sshll.u32 [#allocation4], 4
      %s29 = int_to_ptr.vmem [resolvable:$true] %s28
      %31 = dma.hbm_to_vmem [thread:$0]  %s27, 32, %s29, [#allocation5]
    $region9: #{tpu_custom_call.1} parent=1 // pred_fallthru
      _
    // Predicated region
    $region10: #{tpu_custom_call.1} parent=1 // pred_check
      _
    $region11: #{tpu_custom_call.1} parent=1 // pred_check_branch
      %33 = sbr.rel (0) target = $region13
    $region12: #{tpu_custom_call.1} parent=1 // pred_region
      _
    $region13: #{tpu_custom_call.1} parent=1 // pred_fallthru
      _
    // Predicated region
    $region14: #{tpu_custom_call.1} parent=1 // pred_check
      _
    $region15: #{tpu_custom_call.1} parent=1 // pred_check_branch
      %35 = sbr.rel (0) target = $region17
    $region16: #{tpu_custom_call.1} parent=1 // pred_region
      %37 = dma.done [#allocation3], 128
    $region17: #{tpu_custom_call.1} parent=1 // pred_fallthru
      _
    // Predicated region
    $region18: #{tpu_custom_call.1} parent=1 // pred_check
      _
    $region19: #{tpu_custom_call.1} parent=1 // pred_check_branch
      %39 = sbr.rel (0) target = $region21
    $region20: #{tpu_custom_call.1} parent=1 // pred_region
      %41 = dma.done [#allocation5], 32
    $region21: #{tpu_custom_call.1} parent=1 // pred_fallthru
      _
    %v43 = vld [vmem:[#allocation2] sm:$0xff]
    %v44 = vpack.c.bf16 %v43, %v43
    %v45 = vld [vmem:[#allocation4] sm:$0x3]
    %v46 = vpack.c.bf16 %v45, %v45
    %v47 = vld [vmem:[%s2] sm:$0x1]
    %v49 = vperm.slane %v47, 0
    %51 = vmatpush.bf16.xpose.msra.mxu0 0
    %52 = vmatpush.bf16.xpose.msra.mxu0 0
    %53 = vmatpush.bf16.xpose.msra.mxu0 0
    %54 = vmatpush.bf16.xpose.msra.mxu0 0
    %55 = vmatpush.bf16.xpose.msra.mxu0 0
    %56 = vmatpush.bf16.xpose.msra.mxu0 0
    %57 = vmatpush.bf16.xpose.msra.mxu0 0
    %58 = vmatpush.bf16.xpose.msra.mxu0 %v46
    %59 = vmatmul.bf16.gmra.mxu0 %v44
    %v60 = vpop.f32.mrf.mxu0
    %v61 = vadd.f32 %v49, %v60
    %v62 = vpop.f32.mrf.mxu0
    %63 = vdwg.mxu0
    %vm64 = vcmask 15360
    %65 = vst.msk [vmem:[%s3] sm:$0xff] %vm64, %v61
    // Predicated region
    $region22: #{tpu_custom_call.1} parent=1 // pred_check
      _
    $region23: #{tpu_custom_call.1} parent=1 // pred_check_branch
      %67 = sbr.rel (0) target = $region25
    $region24: #{tpu_custom_call.1} parent=1 // pred_region
      _
    $region25: #{tpu_custom_call.1} parent=1 // pred_fallthru
      _
    // Predicated region
    $region26: #{tpu_custom_call.1} parent=1 // pred_check
      _
    $region27: #{tpu_custom_call.1} parent=1 // pred_check_branch
      %69 = sbr.rel (0) target = $region29
    $region28: #{tpu_custom_call.1} parent=1 // pred_region
      _
    $region29: #{tpu_custom_call.1} parent=1 // pred_fallthru
      _
    %70 = vsyncpa [#allocation3], 1
    %71 = vsyncpa [#allocation5], 1

</llo_original>
